<compile_context>
chip_gen: v7x
topology: tpu7x:2x2x1
jax: 0.10.0
libtpu: 0.0.40
codegen_flags: <defaults>
</compile_context>

<pallas_src>
import jax
import jax.numpy as jnp
from jax import lax
from jax.experimental import pallas as pl
from jax.experimental.pallas import tpu as pltpu

_EPS = 1e-8  # F.cosine_similarity default eps


def _round_up(x, m):
    return ((x + m - 1) // m) * m


def _cdiv(a, b):
    return (a + b - 1) // b


def _cosine_sim_kernel(x1_ref, x2_ref, w_ref, b_ref, out_ref):
    w = w_ref[...]        # (D_in, D_enc_p), matmul dtype (bf16 or f32), VMEM-resident
    bias = b_ref[...]     # (1, D_enc_p), f32, VMEM-resident

    # Two separate MXU matmuls against the same resident W (no concat copy).
    # x tiles are cast to the matmul dtype in VMEM; accumulation stays f32.
    e1 = jnp.dot(x1_ref[...].astype(w.dtype), w,
                 preferred_element_type=jnp.float32) + bias
    e2 = jnp.dot(x2_ref[...].astype(w.dtype), w,
                 preferred_element_type=jnp.float32) + bias

    # Cosine similarity over the feature axis (PyTorch dim=1), f32 epilogue.
    # keepdims=True keeps everything sublane-major -> (tb, 1) store, avoiding
    # a per-step XLU relayout into a lane-major row.
    dot = jnp.sum(e1 * e2, axis=-1, keepdims=True)
    s1 = jnp.sum(e1 * e1, axis=-1, keepdims=True)
    s2 = jnp.sum(e2 * e2, axis=-1, keepdims=True)
    # rsqrt runs on the EUP (its own VLIW slot). Clamping squared norms at
    # eps^2 == clamping each norm at eps (matches F.cosine_similarity).
    inv = (lax.rsqrt(jnp.maximum(s1, _EPS * _EPS)) *
           lax.rsqrt(jnp.maximum(s2, _EPS * _EPS)))
    out_ref[...] = (dot * inv).astype(out_ref.dtype)


def cosine_sim_sts_predictor(x1, x2, w, b, *, tile_b=1024,
                             matmul_dtype=jnp.bfloat16):
    """x1, x2: (B, D_in); w: (D_in, D_enc); b: (D_enc,). Returns (B,) float32."""
    B, D_in = x1.shape
    D_enc = w.shape[1]

    # --- One-time weight prep (amortized across all grid steps) -------------
    # Pad D_enc to a multiple of 128 so MXU columns / VMEM lanes are fully
    # packed; zero columns contribute nothing to dot/s1/s2.
    D_enc_p = _round_up(D_enc, 128)
    w_p = w.astype(matmul_dtype)
    b_p = b.astype(jnp.float32).reshape(1, D_enc)
    if D_enc_p != D_enc:
        w_p = jnp.pad(w_p, ((0, 0), (0, D_enc_p - D_enc)))
        b_p = jnp.pad(b_p, ((0, 0), (0, D_enc_p - D_enc)))
    # x1/x2 are streamed exactly as given: no wrapper-side pad or astype copies.

    x_isz = jnp.dtype(x1.dtype).itemsize
    w_isz = jnp.dtype(w_p.dtype).itemsize

    def vmem_estimate(tb):
        return (
            2 * 2 * tb * D_in * x_isz        # x1, x2 tiles, double-buffered
            + 2 * D_in * D_enc_p * w_isz     # W: pipeline still allocates 2 buffers
            + 2 * D_enc_p * 4                # bias: 2 buffers
            + 2 * tb * 4                     # (tb, 1) output rows, 2 buffers
            + 6 * tb * D_enc_p * 4           # e1/e2 + elementwise f32 temporaries
            + 2 * tb * D_in * w_isz          # in-kernel matmul-dtype casts of x tiles
        )

    # Per-core VMEM capacity (v7x: 64 MiB/TC, v5e/v6e: 128 MiB); keep headroom.
    try:
        vmem_cap = int(pltpu.get_tpu_info().vmem_capacity_bytes)
    except Exception:  # conservative fallback if the query is unavailable
        vmem_cap = 64 << 20
    vmem_budget = int(vmem_cap * 0.8)

    # Batch tile: multiple of 8 (sublane); shrink until 2x the (generous)
    # estimate fits the per-core budget.
    tb = max(8, _round_up(min(tile_b, B), 8))
    while tb > 8 and 2 * vmem_estimate(tb) > vmem_budget:
        tb = max(8, _round_up(tb // 2, 8))

    n_tiles = _cdiv(B, tb)
    # v7x megacore: with a multi-step "parallel" grid, prefer an even number
    # of steps so both TensorCores get work.
    if n_tiles > 1 and n_tiles % 2 == 1:
        tb = max(8, _round_up(_cdiv(B, n_tiles + 1), 8))
        n_tiles = _cdiv(B, tb)

    vmem_limit = int(min(max(2 * vmem_estimate(tb), 16 << 20), vmem_budget))

    # TODO(synk): for encoders where D_in * D_enc no longer fits per-core VMEM
    # (notably v7x's 64 MiB/TC), add a trailing "arbitrary" grid axis over
    # D_enc with f32 scratch holding partial dot/s1/s2, finalized via pl.when.
    out = pl.pallas_call(
        _cosine_sim_kernel,
        out_shape=jax.ShapeDtypeStruct((B, 1), jnp.float32),
        grid=(n_tiles,),
        in_specs=[
            pl.BlockSpec((tb, D_in), lambda i: (i, 0)),
            pl.BlockSpec((tb, D_in), lambda i: (i, 0)),
            pl.BlockSpec((D_in, D_enc_p), lambda i: (0, 0)),  # VMEM-resident W
            pl.BlockSpec((1, D_enc_p), lambda i: (0, 0)),     # VMEM-resident bias
        ],
        out_specs=pl.BlockSpec((tb, 1), lambda i: (i, 0)),
        compiler_params=pltpu.CompilerParams(
            dimension_semantics=("parallel",),
            vmem_limit_bytes=vmem_limit),
    )(x1, x2, w_p, b_p)

    return out.reshape(B)


def _reference(x1, x2, w, b):
    x1 = x1.astype(jnp.float32)
    x2 = x2.astype(jnp.float32)
    w = w.astype(jnp.float32)
    b = b.astype(jnp.float32)
    e1 = x1 @ w + b
    e2 = x2 @ w + b
    dot = jnp.sum(e1 * e2, axis=-1)
    n1 = jnp.maximum(jnp.linalg.norm(e1, axis=-1), _EPS)
    n2 = jnp.maximum(jnp.linalg.norm(e2, axis=-1), _EPS)
    return dot / (n1 * n2)


if __name__ == "__main__":
    # Case 1: small shapes, f32 matmul path -> exact module semantics.
    B, D_in, D_enc = 8, 32, 32
    k1, k2, kw, kb = jax.random.split(jax.random.PRNGKey(0), 4)
    x1 = jax.random.normal(k1, (B, D_in), dtype=jnp.float32)
    x2 = jax.random.normal(k2, (B, D_in), dtype=jnp.float32)
    w = jax.random.normal(kw, (D_in, D_enc), dtype=jnp.float32) * (1.0 / D_in ** 0.5)
    b = jax.random.normal(kb, (D_enc,), dtype=jnp.float32) * 0.1

    out = jax.block_until_ready(
        cosine_sim_sts_predictor(x1, x2, w, b, matmul_dtype=jnp.float32))
    ref = _reference(x1, x2, w, b)
    assert out.shape == (B,)
    assert jnp.allclose(out, ref, atol=1e-4, rtol=1e-4), (out, ref)

    # Case 2: bf16 streaming + bf16 MXU operands (f32 accumulate), multi-tile
    # grid with a ragged last block (B=200, tb=128) exercising masked tail
    # writes and the resident-W pipeline.
    B2, D_in2, D_enc2 = 200, 128, 256
    k1, k2, kw, kb = jax.random.split(jax.random.PRNGKey(1), 4)
    x1b = jax.random.normal(k1, (B2, D_in2), dtype=jnp.float32).astype(jnp.bfloat16)
    x2b = jax.random.normal(k2, (B2, D_in2), dtype=jnp.float32).astype(jnp.bfloat16)
    wb = (jax.random.normal(kw, (D_in2, D_enc2), dtype=jnp.float32)
          * (1.0 / D_in2 ** 0.5)).astype(jnp.bfloat16)
    bb = (jax.random.normal(kb, (D_enc2,), dtype=jnp.float32) * 0.1
          ).astype(jnp.bfloat16)

    out2 = jax.block_until_ready(
        cosine_sim_sts_predictor(x1b, x2b, wb, bb, tile_b=128))
    ref2 = _reference(x1b, x2b, wb, bb)
    assert out2.shape == (B2,)
    max_err = float(jnp.max(jnp.abs(out2 - ref2)))
    assert jnp.allclose(out2, ref2, atol=5e-3, rtol=5e-3), max_err

    print("KERNEL_OK")
</pallas_src>

<mosaic_0001>
module attributes {stable_mosaic.version = 11 : i64} {
  func.func @_cosine_sim_kernel(%arg0: i32, %arg1: memref<8x32xf32, #tpu.memory_space<vmem>>, %arg2: memref<8x32xf32, #tpu.memory_space<vmem>>, %arg3: memref<32x128xf32, #tpu.memory_space<vmem>>, %arg4: memref<1x128xf32, #tpu.memory_space<vmem>>, %arg5: memref<8x1xf32, #tpu.memory_space<vmem>>) attributes {dimension_semantics = [#tpu.dimension_semantics<parallel>], iteration_bounds = array<i64: 1>, scalar_prefetch = 0 : i64, scratch_operands = 0 : i64, tpu.core_type = #tpu.core_type<tc>, window_params = [{transform_indices = @transform_0, window_bounds = array<i64: 8, 32>}, {transform_indices = @transform_1, window_bounds = array<i64: 8, 32>}, {pipeline_mode = #tpu.pipeline_mode<synchronous>, transform_indices = @transform_2, window_bounds = array<i64: 32, 128>}, {pipeline_mode = #tpu.pipeline_mode<synchronous>, transform_indices = @transform_3, window_bounds = array<i64: 1, 128>}, {transform_indices = @transform_4, window_bounds = array<i64: 8, 1>}]} {
    %c0 = arith.constant 0 : index
    %c0_0 = arith.constant 0 : index
    %0 = vector.load %arg3[%c0, %c0_0] : memref<32x128xf32, #tpu.memory_space<vmem>>, vector<32x128xf32>
    %c0_1 = arith.constant 0 : index
    %c0_2 = arith.constant 0 : index
    %1 = vector.load %arg4[%c0_1, %c0_2] : memref<1x128xf32, #tpu.memory_space<vmem>>, vector<1x128xf32>
    %c0_3 = arith.constant 0 : index
    %c0_4 = arith.constant 0 : index
    %2 = vector.load %arg1[%c0_3, %c0_4] : memref<8x32xf32, #tpu.memory_space<vmem>>, vector<8x32xf32>
    %cst = arith.constant dense<0.000000e+00> : vector<8x128xf32>
    %3 = tpu.matmul %2, %0, %cst {dimension_numbers = #tpu.dot_dimension_numbers<[1], [0], [0], [1], [0, 0, 1, 1], [], []>} : vector<8x32xf32>, vector<32x128xf32>, vector<8x128xf32> -> vector<8x128xf32>
    %4 = vector.broadcast %1 : vector<1x128xf32> to vector<8x128xf32>
    %5 = arith.addf %3, %4 : vector<8x128xf32>
    %c0_5 = arith.constant 0 : index
    %c0_6 = arith.constant 0 : index
    %6 = vector.load %arg2[%c0_5, %c0_6] : memref<8x32xf32, #tpu.memory_space<vmem>>, vector<8x32xf32>
    %cst_7 = arith.constant dense<0.000000e+00> : vector<8x128xf32>
    %7 = tpu.matmul %6, %0, %cst_7 {dimension_numbers = #tpu.dot_dimension_numbers<[1], [0], [0], [1], [0, 0, 1, 1], [], []>} : vector<8x32xf32>, vector<32x128xf32>, vector<8x128xf32> -> vector<8x128xf32>
    %8 = vector.broadcast %1 : vector<1x128xf32> to vector<8x128xf32>
    %9 = arith.addf %7, %8 : vector<8x128xf32>
    %10 = arith.mulf %5, %9 : vector<8x128xf32>
    %cst_8 = arith.constant dense<0.000000e+00> : vector<8xf32>
    %11 = vector.multi_reduction <add>, %10, %cst_8 [1] : vector<8x128xf32> to vector<8xf32>
    %12 = vector.shape_cast %11 : vector<8xf32> to vector<8x1xf32>
    %13 = arith.mulf %5, %5 : vector<8x128xf32>
    %cst_9 = arith.constant dense<0.000000e+00> : vector<8xf32>
    %14 = vector.multi_reduction <add>, %13, %cst_9 [1] : vector<8x128xf32> to vector<8xf32>
    %15 = vector.shape_cast %14 : vector<8xf32> to vector<8x1xf32>
    %16 = arith.mulf %9, %9 : vector<8x128xf32>
    %cst_10 = arith.constant dense<0.000000e+00> : vector<8xf32>
    %17 = vector.multi_reduction <add>, %16, %cst_10 [1] : vector<8x128xf32> to vector<8xf32>
    %18 = vector.shape_cast %17 : vector<8xf32> to vector<8x1xf32>
    %cst_11 = arith.constant 1.000000e-16 : f32
    %19 = vector.broadcast %cst_11 : f32 to vector<8x1xf32>
    %20 = arith.maximumf %15, %19 : vector<8x1xf32>
    %21 = math.rsqrt %20 : vector<8x1xf32>
    %cst_12 = arith.constant 1.000000e-16 : f32
    %22 = vector.broadcast %cst_12 : f32 to vector<8x1xf32>
    %23 = arith.maximumf %18, %22 : vector<8x1xf32>
    %24 = math.rsqrt %23 : vector<8x1xf32>
    %25 = arith.mulf %21, %24 : vector<8x1xf32>
    %26 = arith.mulf %12, %25 : vector<8x1xf32>
    %c0_13 = arith.constant 0 : index
    %c0_14 = arith.constant 0 : index
    %27 = vector.load %arg5[%c0_13, %c0_14] : memref<8x1xf32, #tpu.memory_space<vmem>>, vector<8x1xf32>
    tpu.vector_store %arg5[%c0_13, %c0_14], %26 {strides = array<i32>} : memref<8x1xf32, #tpu.memory_space<vmem>>, vector<8x1xf32>,
    return
  }
  func.func @transform_0(%arg0: i32) -> (i32, i32) {
    %c0_i32 = arith.constant 0 : i32
    %c0_i32_0 = arith.constant 0 : i32
    return %arg0, %c0_i32 : i32, i32
  }
  func.func @transform_1(%arg0: i32) -> (i32, i32) {
    %c0_i32 = arith.constant 0 : i32
    %c0_i32_0 = arith.constant 0 : i32
    return %arg0, %c0_i32 : i32, i32
  }
  func.func @transform_2(%arg0: i32) -> (i32, i32) {
    %c0_i32 = arith.constant 0 : i32
    %c0_i32_0 = arith.constant 0 : i32
    %c0_i32_1 = arith.constant 0 : i32
    return %c0_i32, %c0_i32_0 : i32, i32
  }
  func.func @transform_3(%arg0: i32) -> (i32, i32) {
    %c0_i32 = arith.constant 0 : i32
    %c0_i32_0 = arith.constant 0 : i32
    %c0_i32_1 = arith.constant 0 : i32
    return %c0_i32, %c0_i32_0 : i32, i32
  }
  func.func @transform_4(%arg0: i32) -> (i32, i32) {
    %c0_i32 = arith.constant 0 : i32
    %c0_i32_0 = arith.constant 0 : i32
    return %arg0, %c0_i32 : i32, i32
  }
}

</mosaic_0001>

<llo_original>
// kernel: tpu_custom_call.1
$region0: #{tpu_custom_call.1}
  #allocation0 [shape = 'u32[]', space=smem, size = 0x4, offset = 0x4, fixed_abs, tag = 'smem constant byte address 0x4 - core index']
  #allocation1 [shape = 'u32[144,128]{1,0:T(1,128)}', space=vmem, size = 0x12000, scoped, tag = 'internal scratch']
  %s0 = inlined_call_operand.hbm [shape: f32[8,32], index: 0, kind: input, shape index: {}]
  %s1 = inlined_call_operand.hbm [shape: f32[8,32], index: 1, kind: input, shape index: {}]
  %s2 = inlined_call_operand.hbm [shape: f32[32,128], index: 2, kind: input, shape index: {}]
  %s3 = inlined_call_operand.vmem [shape: f32[1,128], index: 3, kind: input, shape index: {}]
  %s4 = inlined_call_operand.vmem [shape: f32[8,1], index: 4, kind: output, shape index: {}]
  %s5 = sld [smem:[#allocation0]]
  $region38: #{tpu_custom_call.1} parent=0
    _
  %s7 = ssub.s32 1, %s5
  %s8 = scalar_select 0, %s7, %s5
  $region1: #{tpu_custom_call.1} parent=0
    #allocation2 [shape = 'u8[4096]{0}', space=vmem, size = 0x1000, scoped, tag = 'input window, operand 0, single buffered']
    #allocation3 [shape = 's32[1]{0}', space=sflag, size = 0x4, scoped, tag = 'scoped memory for tpu_custom_call.1']
    #allocation4 [shape = 'u8[4096]{0}', space=vmem, size = 0x1000, scoped, tag = 'input window, operand 1, single buffered']
    #allocation5 [shape = 's32[1]{0}', space=sflag, size = 0x4, scoped, tag = 'scoped memory for tpu_custom_call.1']
    #allocation6 [shape = 'u8[16384]{0}', space=vmem, size = 0x4000, scoped, tag = 'input window, operand 2, single buffered']
    %9 = vsyncpa [#allocation3], 0
    %10 = vsyncpa [#allocation5], 0
    // Predicated region
    $region2: #{tpu_custom_call.1} parent=1 // pred_check
      _
    $region3: #{tpu_custom_call.1} parent=1 // pred_check_branch
      %12 = sbr.rel (0) target = $region5
    $region4: #{tpu_custom_call.1} parent=1 // pred_region
      %s14 = ssub.s32 128, 128
      %15 = vsyncadd [#allocation3], %s14
      %s17 = sshll.u32 [#allocation2], 4
      %s18 = int_to_ptr.vmem [resolvable:$true] %s17
      %20 = dma.hbm_to_vmem [thread:$0]  %s0, 128, %s18, [#allocation3]
    $region5: #{tpu_custom_call.1} parent=1 // pred_fallthru
      _
    // Predicated region
    $region6: #{tpu_custom_call.1} parent=1 // pred_check
      _
    $region7: #{tpu_custom_call.1} parent=1 // pred_check_branch
      %22 = sbr.rel (0) target = $region9
    $region8: #{tpu_custom_call.1} parent=1 // pred_region
      %s24 = ssub.s32 128, 128
      %25 = vsyncadd [#allocation5], %s24
      %s27 = sshll.u32 [#allocation4], 4
      %s28 = int_to_ptr.vmem [resolvable:$true] %s27
      %30 = dma.hbm_to_vmem [thread:$0]  %s1, 128, %s28, [#allocation5]
    $region9: #{tpu_custom_call.1} parent=1 // pred_fallthru
      _
    // Predicated region
    $region10: #{tpu_custom_call.1} parent=1 // pred_check
      _
    $region11: #{tpu_custom_call.1} parent=1 // pred_check_branch
      %32 = sbr.rel (0) target = $region13
    $region12: #{tpu_custom_call.1} parent=1 // pred_region
      %s34 = ssub.s32 512, 512
      %35 = vsyncadd [#allocation5], %s34
      %s36 = sshll.u32 [#allocation6], 4
      %s37 = int_to_ptr.vmem [resolvable:$true] %s36
      %42 = dma.hbm_to_vmem [thread:$0]  %s2, 512, %s37, [#allocation5], 128, 128, 8
    $region13: #{tpu_custom_call.1} parent=1 // pred_fallthru
      _
    // Predicated region
    $region14: #{tpu_custom_call.1} parent=1 // pred_check
      _
    $region15: #{tpu_custom_call.1} parent=1 // pred_check_branch
      %44 = sbr.rel (0) target = $region17
    $region16: #{tpu_custom_call.1} parent=1 // pred_region
      _
    $region17: #{tpu_custom_call.1} parent=1 // pred_fallthru
      _
    // Predicated region
    $region18: #{tpu_custom_call.1} parent=1 // pred_check
      _
    $region19: #{tpu_custom_call.1} parent=1 // pred_check_branch
      %46 = sbr.rel (0) target = $region21
    $region20: #{tpu_custom_call.1} parent=1 // pred_region
      %47 = dma.done [#allocation3], 128
    $region21: #{tpu_custom_call.1} parent=1 // pred_fallthru
      _
    // Predicated region
    $region22: #{tpu_custom_call.1} parent=1 // pred_check
      _
    $region23: #{tpu_custom_call.1} parent=1 // pred_check_branch
      %49 = sbr.rel (0) target = $region25
    $region24: #{tpu_custom_call.1} parent=1 // pred_region
      %50 = dma.done [#allocation5], 128
    $region25: #{tpu_custom_call.1} parent=1 // pred_fallthru
      _
    // Predicated region
    $region26: #{tpu_custom_call.1} parent=1 // pred_check
      _
    $region27: #{tpu_custom_call.1} parent=1 // pred_check_branch
      %52 = sbr.rel (0) target = $region29
    $region28: #{tpu_custom_call.1} parent=1 // pred_region
      %53 = dma.done [#allocation5], 512
    $region29: #{tpu_custom_call.1} parent=1 // pred_fallthru
      _
    %v54 = vld [vmem:[#allocation6] sm:$0xff]
    %v55 = vld [vmem:[#allocation6 + $0x8] sm:$0xff]
    %v56 = vld [vmem:[#allocation6 + $0x10] sm:$0xff]
    %v57 = vld [vmem:[#allocation6 + $0x18] sm:$0xff]
    %v58 = vld [vmem:[%s3] sm:$0x1]
    %v59 = vld [vmem:[#allocation2] sm:$0xff]
    %v61 = vlaneseq
    %v62 = vshrl.u32 %v61, 7
    %v63 = vsub.s32 0, %v62
    %v64 = vrot.slane %v58, %v63
    %vm66 = vcmask 261120
    %v68 = vsel %vm66, %v59, 0
    %70 = vmatprep.subr.mxu0 0.0
    %71 = vmatpush1.msra.mxu0 %v54
    %72 = vmatprep.subr.mxu0 0.0
    %73 = vmatpush1.msra.mxu0 %v55
    %74 = vmatprep.subr.mxu0 0.0
    %75 = vmatpush1.msra.mxu0 %v56
    %76 = vmatprep.subr.mxu0 0.0
    %77 = vmatpush1.msra.mxu0 %v57
    %78 = vmatprep.subr.mxu0 0.0
    %79 = vmatpush1.msra.mxu0 0.0
    %80 = vmatprep.subr.mxu0 0.0
    %81 = vmatpush1.msra.mxu0 0.0
    %82 = vmatprep.subr.mxu0 0.0
    %83 = vmatpush1.msra.mxu0 0.0
    %84 = vmatprep.subr.mxu0 0.0
    %85 = vmatpush1.msra.mxu0 0.0
    %86 = vmatprep.subr.mxu0 0.0
    %87 = vmatpush1.msra.mxu0 0.0
    %88 = vmatprep.subr.mxu0 0.0
    %89 = vmatpush1.msra.mxu0 0.0
    %90 = vmatprep.subr.mxu0 0.0
    %91 = vmatpush1.msra.mxu0 0.0
    %92 = vmatprep.subr.mxu0 0.0
    %93 = vmatpush1.msra.mxu0 0.0
    %94 = vmatprep.subr.mxu0 0.0
    %95 = vmatpush1.msra.mxu0 0.0
    %96 = vmatprep.subr.mxu0 0.0
    %97 = vmatpush1.msra.mxu0 0.0
    %98 = vmatprep.subr.mxu0 0.0
    %99 = vmatpush1.msra.mxu0 0.0
    %100 = vmatprep.subr.mxu0 0.0
    %101 = vmatpush1.msra.mxu0 0.0
    %102 = vmatprep.subr.mxu0 0.0
    %103 = vmatpush1.msra.mxu0 0.0
    %104 = vmatprep.subr.mxu0 0.0
    %105 = vmatpush1.msra.mxu0 0.0
    %106 = vmatprep.subr.mxu0 0.0
    %107 = vmatpush1.msra.mxu0 0.0
    %108 = vmatprep.subr.mxu0 0.0
    %109 = vmatpush1.msra.mxu0 0.0
    %110 = vmatprep.subr.mxu0 0.0
    %111 = vmatpush1.msra.mxu0 0.0
    %112 = vmatprep.subr.mxu0 0.0
    %113 = vmatpush1.msra.mxu0 0.0
    %114 = vmatprep.subr.mxu0 0.0
    %115 = vmatpush1.msra.mxu0 0.0
    %116 = vmatprep.subr.mxu0 0.0
    %117 = vmatpush1.msra.mxu0 0.0
    %118 = vmatprep.subr.mxu0 0.0
    %119 = vmatpush1.msra.mxu0 0.0
    %120 = vmatprep.subr.mxu0 0.0
    %121 = vmatpush1.msra.mxu0 0.0
    %122 = vmatprep.subr.mxu0 0.0
    %123 = vmatpush1.msra.mxu0 0.0
    %124 = vmatprep.subr.mxu0 0.0
    %125 = vmatpush1.msra.mxu0 0.0
    %126 = vmatprep.subr.mxu0 0.0
    %127 = vmatpush1.msra.mxu0 0.0
    %128 = vmatprep.subr.mxu0 0.0
    %129 = vmatpush1.msra.mxu0 0.0
    %130 = vmatprep.subr.mxu0 0.0
    %131 = vmatpush1.msra.mxu0 0.0
    %132 = vmatprep.subr.mxu0 0.0
    %133 = vmatpush1.msra.mxu0 0.0
    %134 = vmatprep.mubr.f32.mxu0 0.0
    %135 = vmatmul.mubr.f32.gmra.mrb[0].mxu0 %v68
    %v136 = vpop.f32.mrb[0].mxu0
    %v137 = vadd.f32 %v64, %v136
    %v138 = vpop.f32.mrb[0].mxu0
    %139 = vdwg.mxu0
    %v140 = vld [vmem:[#allocation4] sm:$0xff]
    %v142 = vsel %vm66, %v140, 0
    %144 = vmatprep.subr.mxu0 0.0
    %145 = vmatpush1.msra.mxu0 %v54
    %146 = vmatprep.subr.mxu0 0.0
    %147 = vmatpush1.msra.mxu0 %v55
    %148 = vmatprep.subr.mxu0 0.0
    %149 = vmatpush1.msra.mxu0 %v56
    %150 = vmatprep.subr.mxu0 0.0
    %151 = vmatpush1.msra.mxu0 %v57
    %152 = vmatprep.subr.mxu0 0.0
    %153 = vmatpush1.msra.mxu0 0.0
    %154 = vmatprep.subr.mxu0 0.0
    %155 = vmatpush1.msra.mxu0 0.0
    %156 = vmatprep.subr.mxu0 0.0
    %157 = vmatpush1.msra.mxu0 0.0
    %158 = vmatprep.subr.mxu0 0.0
    %159 = vmatpush1.msra.mxu0 0.0
    %160 = vmatprep.subr.mxu0 0.0
    %161 = vmatpush1.msra.mxu0 0.0
    %162 = vmatprep.subr.mxu0 0.0
    %163 = vmatpush1.msra.mxu0 0.0
    %164 = vmatprep.subr.mxu0 0.0
    %165 = vmatpush1.msra.mxu0 0.0
    %166 = vmatprep.subr.mxu0 0.0
    %167 = vmatpush1.msra.mxu0 0.0
    %168 = vmatprep.subr.mxu0 0.0
    %169 = vmatpush1.msra.mxu0 0.0
    %170 = vmatprep.subr.mxu0 0.0
    %171 = vmatpush1.msra.mxu0 0.0
    %172 = vmatprep.subr.mxu0 0.0
    %173 = vmatpush1.msra.mxu0 0.0
    %174 = vmatprep.subr.mxu0 0.0
    %175 = vmatpush1.msra.mxu0 0.0
    %176 = vmatprep.subr.mxu0 0.0
    %177 = vmatpush1.msra.mxu0 0.0
    %178 = vmatprep.subr.mxu0 0.0
    %179 = vmatpush1.msra.mxu0 0.0
    %180 = vmatprep.subr.mxu0 0.0
    %181 = vmatpush1.msra.mxu0 0.0
    %182 = vmatprep.subr.mxu0 0.0
    %183 = vmatpush1.msra.mxu0 0.0
    %184 = vmatprep.subr.mxu0 0.0
    %185 = vmatpush1.msra.mxu0 0.0
    %186 = vmatprep.subr.mxu0 0.0
    %187 = vmatpush1.msra.mxu0 0.0
    %188 = vmatprep.subr.mxu0 0.0
    %189 = vmatpush1.msra.mxu0 0.0
    %190 = vmatprep.subr.mxu0 0.0
    %191 = vmatpush1.msra.mxu0 0.0
    %192 = vmatprep.subr.mxu0 0.0
    %193 = vmatpush1.msra.mxu0 0.0
    %194 = vmatprep.subr.mxu0 0.0
    %195 = vmatpush1.msra.mxu0 0.0
    %196 = vmatprep.subr.mxu0 0.0
    %197 = vmatpush1.msra.mxu0 0.0
    %198 = vmatprep.subr.mxu0 0.0
    %199 = vmatpush1.msra.mxu0 0.0
    %200 = vmatprep.subr.mxu0 0.0
    %201 = vmatpush1.msra.mxu0 0.0
    %202 = vmatprep.subr.mxu0 0.0
    %203 = vmatpush1.msra.mxu0 0.0
    %204 = vmatprep.subr.mxu0 0.0
    %205 = vmatpush1.msra.mxu0 0.0
    %206 = vmatprep.subr.mxu0 0.0
    %207 = vmatpush1.msra.mxu0 0.0
    %208 = vmatprep.mubr.f32.mxu0 0.0
    %209 = vmatmul.mubr.f32.gmra.mrb[0].mxu0 %v142
    %v210 = vpop.f32.mrb[0].mxu0
    %v211 = vadd.f32 %v64, %v210
    %v212 = vpop.f32.mrb[0].mxu0
    %213 = vdwg.mxu0
    %v214 = vmul.f32 %v137, %v211
    %215 = vadd.xlane.f32.xlu0 %v214
    %v216 = vpop.xlane.xlu0 %215
    %v217 = vmul.f32 %v137, %v137
    %218 = vadd.xlane.f32.xlu0 %v217
    %v219 = vpop.xlane.xlu0 %218
    %v220 = vmul.f32 %v211, %v211
    %221 = vadd.xlane.f32.xlu0 %v220
    %v222 = vpop.xlane.xlu0 %221
    %v223 = vmax.f32 %v219, 1e-16
    %v224 = vrsqrt.pop %v223
    %v225 = vmax.f32 %v222, 1e-16
    %v226 = vrsqrt.pop %v225
    %v227 = vmul.f32 %v224, %v226
    %v228 = vmul.f32 %v216, %v227
    %vm229 = vcmask 7168
    %230 = vst.msk [vmem:[%s4] sm:$0xff] %vm229, %v228
    // Predicated region
    $region30: #{tpu_custom_call.1} parent=1 // pred_check
      _
    $region31: #{tpu_custom_call.1} parent=1 // pred_check_branch
      %232 = sbr.rel (0) target = $region33
    $region32: #{tpu_custom_call.1} parent=1 // pred_region
      _
    $region33: #{tpu_custom_call.1} parent=1 // pred_fallthru
      _
    // Predicated region
    $region34: #{tpu_custom_call.1} parent=1 // pred_check
      _
    $region35: #{tpu_custom_call.1} parent=1 // pred_check_branch
      %234 = sbr.rel (0) target = $region37
    $region36: #{tpu_custom_call.1} parent=1 // pred_region
      _
    $region37: #{tpu_custom_call.1} parent=1 // pred_fallthru
      _
    %235 = vsyncpa [#allocation3], 1
    %236 = vsyncpa [#allocation5], 1

</llo_original>
